<compile_context>
chip_gen: v7x
topology: tpu7x:2x2x1
jax: 0.10.0
libtpu: 0.0.40
codegen_flags: <defaults>
</compile_context>

<pallas_src>
import functools

import jax
import jax.numpy as jnp
from jax.experimental import pallas as pl
from jax.experimental.pallas import tpu as pltpu


def _round_up(a, b):
    return (a + b - 1) // b * b


def _conv_shifted_gemm_kernel(x_ref, w_ref, b_ref, o_ref, acc_ref, *,
                              tap_offsets, negative_slope):
    """One (image n, Co-tile, C-tile) grid step.

    x_ref   : (1, TC, L_in)   flattened padded image band (resident per n)
    w_ref   : (KK, TCo, TC)   per-tap weight matrices (tiny, resident)
    b_ref   : (TCo, 1)        bias
    o_ref   : (1, TCo, L_out) flat output slab, L_out multiple of 128
    acc_ref : (TCo, L_out)    f32 accumulator across the C grid axis
    """
    c_step = pl.program_id(2)

    @pl.when(c_step == 0)
    def _():
        acc_ref[...] = jnp.zeros_like(acc_ref)

    L = acc_ref.shape[-1]
    acc = acc_ref[...]
    # KH*KW shifted matmuls against the resident input band — this *is* the
    # im2col, done as static VMEM window reads instead of an HBM blow-up.
    for t, off in enumerate(tap_offsets):
        acc = acc + jnp.dot(w_ref[t], x_ref[0, :, off:off + L],
                            preferred_element_type=jnp.float32)
    acc_ref[...] = acc

    @pl.when(c_step == pl.num_programs(2) - 1)
    def _():
        r = acc_ref[...] + b_ref[...].astype(jnp.float32)
        o_ref[0] = jnp.where(r >= 0, r, negative_slope * r).astype(o_ref.dtype)


def conv2d_leaky_relu(x, weight, bias, *, stride=1, padding=0, dilation=1,
                      negative_slope=0.2, compute_dtype=None,
                      co_tile=256, c_tile=256):
    """Conv2d(NCHW, OIHW) + LeakyReLU, matching the PyTorch module's forward."""
    if stride != 1:
        # TODO(synk): strided conv breaks the contiguous flat-window trick; the
        # STTN Conv2D module defaults to stride=1 which is all we lower here.
        raise NotImplementedError("Pallas Conv2D path implements stride=1 only")

    N, C, H, W = x.shape
    Co, Ci, KH, KW = weight.shape
    assert Ci == C, (Ci, C)
    d = dilation

    Hp, Wp = H + 2 * padding, W + 2 * padding
    Ho = Hp - d * (KH - 1)
    Wo = Wp - d * (KW - 1)
    assert Ho > 0 and Wo > 0

    # ---- channel tiling (pad only when a dim actually gets tiled) ----------
    if Co > co_tile:
        TCo, Co_pad = co_tile, _round_up(Co, co_tile)
    else:
        TCo, Co_pad = Co, Co
    if C > c_tile:
        TC, C_pad = c_tile, _round_up(C, c_tile)
    else:
        TC, C_pad = C, C

    # ---- flat-domain geometry ----------------------------------------------
    # Output pixel (ho, wo) at tap (kh, kw) reads flat index
    #     d*(kh*Wp + kw) + ho*Wp + wo
    # so each tap's rhs is ONE contiguous window of the flattened padded image.
    # Columns wo in [Wo, Wp) of each output row are wrap-around garbage and are
    # sliced off in the wrapper.
    KK = KH * KW
    tap_offsets = tuple(d * (kh * Wp + kw) for kh in range(KH) for kw in range(KW))
    L_out = _round_up(Ho * Wp, 128)                 # lane-dense output slab
    need = tap_offsets[-1] + L_out                  # farthest flat read (+1)
    extra = max(need - Hp * Wp, 0)
    extra_rows = (extra + Wp - 1) // Wp
    Hp_ext = Hp + extra_rows
    L_in = Hp_ext * Wp

    cdt = jnp.dtype(compute_dtype) if compute_dtype is not None else jnp.dtype(x.dtype)

    # Single pad pass: spatial padding + tail rows + (optional) channel pad.
    # The reshape to the flat domain is free (contiguous NCHW).
    x_p = jnp.pad(x, ((0, 0), (0, C_pad - C),
                      (padding, padding + extra_rows),
                      (padding, padding)))
    x_flat = x_p.reshape(N, C_pad, L_in).astype(cdt)

    # Tiny weight permutation (Co,C,KH,KW) -> (KK, Co, C); activations are
    # never transposed in HBM.
    w_taps = jnp.transpose(weight, (2, 3, 0, 1)).reshape(KK, Co, C)
    if (Co_pad, C_pad) != (Co, C):
        w_taps = jnp.pad(w_taps, ((0, 0), (0, Co_pad - Co), (0, C_pad - C)))
    w_taps = w_taps.astype(cdt)
    b_mat = jnp.pad(bias.astype(jnp.float32), (0, Co_pad - Co)).reshape(Co_pad, 1)

    n_co, n_c = Co_pad // TCo, C_pad // TC
    grid = (N, n_co, n_c)

    # ---- VMEM budget: double-buffered streaming blocks + resident scratch ---
    itm = cdt.itemsize
    out_itm = jnp.dtype(x.dtype).itemsize
    ws = (2 * TC * L_in * itm            # input band
          + 2 * KK * TCo * TC * itm      # weights
          + 2 * TCo * 4                  # bias
          + 2 * TCo * L_out * out_itm    # output slab
          + TCo * L_out * 4)             # f32 accumulator
    vmem_limit = int(min(max(32 * 2**20, 2 * ws), 64 * 2**20))

    cost = pl.CostEstimate(
        flops=2 * N * KK * Co_pad * C_pad * L_out,
        transcendentals=0,
        bytes_accessed=(N * C_pad * L_in + KK * Co_pad * C_pad) * itm
        + N * Co_pad * L_out * out_itm + Co_pad * 4,
    )

    kernel = functools.partial(_conv_shifted_gemm_kernel,
                               tap_offsets=tap_offsets,
                               negative_slope=negative_slope)

    out_flat = pl.pallas_call(
        kernel,
        out_shape=jax.ShapeDtypeStruct((N, Co_pad, L_out), x.dtype),
        grid_spec=pltpu.PrefetchScalarGridSpec(
            num_scalar_prefetch=0,
            grid=grid,
            in_specs=[
                # Flattened padded image; re-fetched only when n (or the C
                # reduction tile) changes — never K*K-inflated.
                pl.BlockSpec((1, TC, L_in), lambda n, co, c: (n, c, 0)),
                # Per-tap weight matrices (tiny, effectively resident).
                pl.BlockSpec((KK, TCo, TC), lambda n, co, c: (0, co, c)),
                pl.BlockSpec((TCo, 1), lambda n, co, c: (co, 0)),
            ],
            out_specs=pl.BlockSpec((1, TCo, L_out), lambda n, co, c: (n, co, 0)),
            scratch_shapes=[pltpu.VMEM((TCo, L_out), jnp.float32)],
        ),
        compiler_params=pltpu.CompilerParams(
            dimension_semantics=("parallel", "parallel", "arbitrary"),
            vmem_limit_bytes=vmem_limit,
        ),
        cost_estimate=cost,
    )(x_flat, w_taps, b_mat)

    # Only post-kernel pass: drop padded Co rows, the lane tail, and the
    # (Wp - Wo) wrap-around columns.  (Replaces the previous full transpose.)
    out = out_flat[:, :Co, :Ho * Wp].reshape(N, Co, Ho, Wp)[:, :, :, :Wo]
    return out


def _reference(x, weight, bias, *, stride=1, padding=0, dilation=1,
               negative_slope=0.2):
    """Pure-JAX (XLA) reference matching PyTorch Conv2d + LeakyReLU."""
    out = jax.lax.conv_general_dilated(
        x.astype(jnp.float32), weight.astype(jnp.float32),
        window_strides=(stride, stride),
        padding=((padding, padding), (padding, padding)),
        rhs_dilation=(dilation, dilation),
        dimension_numbers=("NCHW", "OIHW", "NCHW"))
    out = out + bias.astype(jnp.float32)[None, :, None, None]
    out = jnp.where(out >= 0, out, negative_slope * out)
    return out.astype(x.dtype)


if __name__ == "__main__":
    key = jax.random.PRNGKey(0)
    k1, k2, k3 = jax.random.split(key, 3)

    N, Cin, H, W = 2, 4, 16, 16
    Cout, K = 8, 3

    x = jax.random.normal(k1, (N, Cin, H, W), dtype=jnp.float32)
    weight = jax.random.normal(k2, (Cout, Cin, K, K), dtype=jnp.float32) * 0.1
    bias = jax.random.normal(k3, (Cout,), dtype=jnp.float32) * 0.1

    # VALID conv (padding=0), as in the module defaults.
    out = conv2d_leaky_relu(x, weight, bias)
    out = jax.block_until_ready(out)
    assert out.shape == (N, Cout, H - 2, W - 2), out.shape
    ref = _reference(x, weight, bias)
    assert jnp.allclose(out, ref, atol=1e-4, rtol=1e-4), "mismatch (padding=0)"

    # SAME-ish conv (padding=1) exercises the spatial-padding path.
    out_p = conv2d_leaky_relu(x, weight, bias, padding=1)
    out_p = jax.block_until_ready(out_p)
    assert out_p.shape == (N, Cout, H, W), out_p.shape
    ref_p = _reference(x, weight, bias, padding=1)
    assert jnp.allclose(out_p, ref_p, atol=1e-4, rtol=1e-4), "mismatch (padding=1)"

    print("KERNEL_OK")
</pallas_src>

<mosaic_0001>
module attributes {stable_mosaic.version = 11 : i64} {
  func.func @_conv_shifted_gemm_kernel(%arg0: i32, %arg1: i32, %arg2: i32, %arg3: memref<1x4x304xf32, #tpu.memory_space<vmem>>, %arg4: memref<9x8x4xf32, #tpu.memory_space<vmem>>, %arg5: memref<8x1xf32, #tpu.memory_space<vmem>>, %arg6: memref<1x8x256xf32, #tpu.memory_space<vmem>>, %arg7: memref<8x256xf32, #tpu.memory_space<vmem>>) attributes {dimension_semantics = [#tpu.dimension_semantics<parallel>, #tpu.dimension_semantics<parallel>, #tpu.dimension_semantics<arbitrary>], iteration_bounds = array<i64: 2, 1, 1>, scalar_prefetch = 0 : i64, scratch_operands = 1 : i64, tpu.core_type = #tpu.core_type<tc>, window_params = [{transform_indices = @transform_0, window_bounds = array<i64: 1, 4, 304>}, {transform_indices = @transform_1, window_bounds = array<i64: 9, 8, 4>}, {transform_indices = @transform_2, window_bounds = array<i64: 8, 1>}, {transform_indices = @transform_3, window_bounds = array<i64: 1, 8, 256>}]} {
    %c0_i32 = arith.constant 0 : i32
    %0 = arith.cmpi eq, %arg2, %c0_i32 : i32
    %1 = arith.extui %0 : i1 to i32
    %c0_i32_0 = arith.constant 0 : i32
    %2 = arith.cmpi ne, %1, %c0_i32_0 : i32
    scf.if %2 {
      %cst_54 = arith.constant 0.000000e+00 : f32
      %62 = vector.broadcast %cst_54 : f32 to vector<8x256xf32>
      %c0_55 = arith.constant 0 : index
      %c0_56 = arith.constant 0 : index
      %63 = vector.load %arg7[%c0_55, %c0_56] : memref<8x256xf32, #tpu.memory_space<vmem>>, vector<8x256xf32>
      tpu.vector_store %arg7[%c0_55, %c0_56], %62 {strides = array<i32>} : memref<8x256xf32, #tpu.memory_space<vmem>>, vector<8x256xf32>,
    } else {
    }
    %c0 = arith.constant 0 : index
    %c0_1 = arith.constant 0 : index
    %3 = vector.load %arg7[%c0, %c0_1] : memref<8x256xf32, #tpu.memory_space<vmem>>, vector<8x256xf32>
    %c0_2 = arith.constant 0 : index
    %c0_3 = arith.constant 0 : index
    %c0_4 = arith.constant 0 : index
    %4 = vector.load %arg4[%c0_2, %c0_3, %c0_4] : memref<9x8x4xf32, #tpu.memory_space<vmem>>, vector<1x8x4xf32>
    %5 = vector.shape_cast %4 : vector<1x8x4xf32> to vector<8x4xf32>
    %c0_5 = arith.constant 0 : index
    %c0_6 = arith.constant 0 : index
    %c0_7 = arith.constant 0 : index
    %6 = vector.load %arg3[%c0_5, %c0_6, %c0_7] : memref<1x4x304xf32, #tpu.memory_space<vmem>>, vector<1x4x256xf32>
    %7 = vector.shape_cast %6 : vector<1x4x256xf32> to vector<4x256xf32>
    %cst = arith.constant dense<0.000000e+00> : vector<8x256xf32>
    %8 = tpu.matmul %5, %7, %cst {dimension_numbers = #tpu.dot_dimension_numbers<[1], [0], [0], [1], [0, 0, 1, 1], [], []>} : vector<8x4xf32>, vector<4x256xf32>, vector<8x256xf32> -> vector<8x256xf32>
    %9 = arith.addf %3, %8 : vector<8x256xf32>
    %c1 = arith.constant 1 : index
    %c0_8 = arith.constant 0 : index
    %c0_9 = arith.constant 0 : index
    %10 = vector.load %arg4[%c1, %c0_8, %c0_9] : memref<9x8x4xf32, #tpu.memory_space<vmem>>, vector<1x8x4xf32>
    %11 = vector.shape_cast %10 : vector<1x8x4xf32> to vector<8x4xf32>
    %c0_10 = arith.constant 0 : index
    %c0_11 = arith.constant 0 : index
    %c1_12 = arith.constant 1 : index
    %12 = vector.load %arg3[%c0_10, %c0_11, %c1_12] : memref<1x4x304xf32, #tpu.memory_space<vmem>>, vector<1x4x256xf32>
    %13 = vector.shape_cast %12 : vector<1x4x256xf32> to vector<4x256xf32>
    %cst_13 = arith.constant dense<0.000000e+00> : vector<8x256xf32>
    %14 = tpu.matmul %11, %13, %cst_13 {dimension_numbers = #tpu.dot_dimension_numbers<[1], [0], [0], [1], [0, 0, 1, 1], [], []>} : vector<8x4xf32>, vector<4x256xf32>, vector<8x256xf32> -> vector<8x256xf32>
    %15 = arith.addf %9, %14 : vector<8x256xf32>
    %c2 = arith.constant 2 : index
    %c0_14 = arith.constant 0 : index
    %c0_15 = arith.constant 0 : index
    %16 = vector.load %arg4[%c2, %c0_14, %c0_15] : memref<9x8x4xf32, #tpu.memory_space<vmem>>, vector<1x8x4xf32>
    %17 = vector.shape_cast %16 : vector<1x8x4xf32> to vector<8x4xf32>
    %c0_16 = arith.constant 0 : index
    %c0_17 = arith.constant 0 : index
    %c2_18 = arith.constant 2 : index
    %18 = vector.load %arg3[%c0_16, %c0_17, %c2_18] : memref<1x4x304xf32, #tpu.memory_space<vmem>>, vector<1x4x256xf32>
    %19 = vector.shape_cast %18 : vector<1x4x256xf32> to vector<4x256xf32>
    %cst_19 = arith.constant dense<0.000000e+00> : vector<8x256xf32>
    %20 = tpu.matmul %17, %19, %cst_19 {dimension_numbers = #tpu.dot_dimension_numbers<[1], [0], [0], [1], [0, 0, 1, 1], [], []>} : vector<8x4xf32>, vector<4x256xf32>, vector<8x256xf32> -> vector<8x256xf32>
    %21 = arith.addf %15, %20 : vector<8x256xf32>
    %c3 = arith.constant 3 : index
    %c0_20 = arith.constant 0 : index
    %c0_21 = arith.constant 0 : index
    %22 = vector.load %arg4[%c3, %c0_20, %c0_21] : memref<9x8x4xf32, #tpu.memory_space<vmem>>, vector<1x8x4xf32>
    %23 = vector.shape_cast %22 : vector<1x8x4xf32> to vector<8x4xf32>
    %c0_22 = arith.constant 0 : index
    %c0_23 = arith.constant 0 : index
    %c16 = arith.constant 16 : index
    %24 = vector.load %arg3[%c0_22, %c0_23, %c16] : memref<1x4x304xf32, #tpu.memory_space<vmem>>, vector<1x4x256xf32>
    %25 = vector.shape_cast %24 : vector<1x4x256xf32> to vector<4x256xf32>
    %cst_24 = arith.constant dense<0.000000e+00> : vector<8x256xf32>
    %26 = tpu.matmul %23, %25, %cst_24 {dimension_numbers = #tpu.dot_dimension_numbers<[1], [0], [0], [1], [0, 0, 1, 1], [], []>} : vector<8x4xf32>, vector<4x256xf32>, vector<8x256xf32> -> vector<8x256xf32>
    %27 = arith.addf %21, %26 : vector<8x256xf32>
    %c4 = arith.constant 4 : index
    %c0_25 = arith.constant 0 : index
    %c0_26 = arith.constant 0 : index
    %28 = vector.load %arg4[%c4, %c0_25, %c0_26] : memref<9x8x4xf32, #tpu.memory_space<vmem>>, vector<1x8x4xf32>
    %29 = vector.shape_cast %28 : vector<1x8x4xf32> to vector<8x4xf32>
    %c0_27 = arith.constant 0 : index
    %c0_28 = arith.constant 0 : index
    %c17 = arith.constant 17 : index
    %30 = vector.load %arg3[%c0_27, %c0_28, %c17] : memref<1x4x304xf32, #tpu.memory_space<vmem>>, vector<1x4x256xf32>
    %31 = vector.shape_cast %30 : vector<1x4x256xf32> to vector<4x256xf32>
    %cst_29 = arith.constant dense<0.000000e+00> : vector<8x256xf32>
    %32 = tpu.matmul %29, %31, %cst_29 {dimension_numbers = #tpu.dot_dimension_numbers<[1], [0], [0], [1], [0, 0, 1, 1], [], []>} : vector<8x4xf32>, vector<4x256xf32>, vector<8x256xf32> -> vector<8x256xf32>
    %33 = arith.addf %27, %32 : vector<8x256xf32>
    %c5 = arith.constant 5 : index
    %c0_30 = arith.constant 0 : index
    %c0_31 = arith.constant 0 : index
    %34 = vector.load %arg4[%c5, %c0_30, %c0_31] : memref<9x8x4xf32, #tpu.memory_space<vmem>>, vector<1x8x4xf32>
    %35 = vector.shape_cast %34 : vector<1x8x4xf32> to vector<8x4xf32>
    %c0_32 = arith.constant 0 : index
    %c0_33 = arith.constant 0 : index
    %c18 = arith.constant 18 : index
    %36 = vector.load %arg3[%c0_32, %c0_33, %c18] : memref<1x4x304xf32, #tpu.memory_space<vmem>>, vector<1x4x256xf32>
    %37 = vector.shape_cast %36 : vector<1x4x256xf32> to vector<4x256xf32>
    %cst_34 = arith.constant dense<0.000000e+00> : vector<8x256xf32>
    %38 = tpu.matmul %35, %37, %cst_34 {dimension_numbers = #tpu.dot_dimension_numbers<[1], [0], [0], [1], [0, 0, 1, 1], [], []>} : vector<8x4xf32>, vector<4x256xf32>, vector<8x256xf32> -> vector<8x256xf32>
    %39 = arith.addf %33, %38 : vector<8x256xf32>
    %c6 = arith.constant 6 : index
    %c0_35 = arith.constant 0 : index
    %c0_36 = arith.constant 0 : index
    %40 = vector.load %arg4[%c6, %c0_35, %c0_36] : memref<9x8x4xf32, #tpu.memory_space<vmem>>, vector<1x8x4xf32>
    %41 = vector.shape_cast %40 : vector<1x8x4xf32> to vector<8x4xf32>
    %c0_37 = arith.constant 0 : index
    %c0_38 = arith.constant 0 : index
    %c32 = arith.constant 32 : index
    %42 = vector.load %arg3[%c0_37, %c0_38, %c32] : memref<1x4x304xf32, #tpu.memory_space<vmem>>, vector<1x4x256xf32>
    %43 = vector.shape_cast %42 : vector<1x4x256xf32> to vector<4x256xf32>
    %cst_39 = arith.constant dense<0.000000e+00> : vector<8x256xf32>
    %44 = tpu.matmul %41, %43, %cst_39 {dimension_numbers = #tpu.dot_dimension_numbers<[1], [0], [0], [1], [0, 0, 1, 1], [], []>} : vector<8x4xf32>, vector<4x256xf32>, vector<8x256xf32> -> vector<8x256xf32>
    %45 = arith.addf %39, %44 : vector<8x256xf32>
    %c7 = arith.constant 7 : index
    %c0_40 = arith.constant 0 : index
    %c0_41 = arith.constant 0 : index
    %46 = vector.load %arg4[%c7, %c0_40, %c0_41] : memref<9x8x4xf32, #tpu.memory_space<vmem>>, vector<1x8x4xf32>
    %47 = vector.shape_cast %46 : vector<1x8x4xf32> to vector<8x4xf32>
    %c0_42 = arith.constant 0 : index
    %c0_43 = arith.constant 0 : index
    %c33 = arith.constant 33 : index
    %48 = vector.load %arg3[%c0_42, %c0_43, %c33] : memref<1x4x304xf32, #tpu.memory_space<vmem>>, vector<1x4x256xf32>
    %49 = vector.shape_cast %48 : vector<1x4x256xf32> to vector<4x256xf32>
    %cst_44 = arith.constant dense<0.000000e+00> : vector<8x256xf32>
    %50 = tpu.matmul %47, %49, %cst_44 {dimension_numbers = #tpu.dot_dimension_numbers<[1], [0], [0], [1], [0, 0, 1, 1], [], []>} : vector<8x4xf32>, vector<4x256xf32>, vector<8x256xf32> -> vector<8x256xf32>
    %51 = arith.addf %45, %50 : vector<8x256xf32>
    %c8 = arith.constant 8 : index
    %c0_45 = arith.constant 0 : index
    %c0_46 = arith.constant 0 : index
    %52 = vector.load %arg4[%c8, %c0_45, %c0_46] : memref<9x8x4xf32, #tpu.memory_space<vmem>>, vector<1x8x4xf32>
    %53 = vector.shape_cast %52 : vector<1x8x4xf32> to vector<8x4xf32>
    %c0_47 = arith.constant 0 : index
    %c0_48 = arith.constant 0 : index
    %c34 = arith.constant 34 : index
    %54 = vector.load %arg3[%c0_47, %c0_48, %c34] : memref<1x4x304xf32, #tpu.memory_space<vmem>>, vector<1x4x256xf32>
    %55 = vector.shape_cast %54 : vector<1x4x256xf32> to vector<4x256xf32>
    %cst_49 = arith.constant dense<0.000000e+00> : vector<8x256xf32>
    %56 = tpu.matmul %53, %55, %cst_49 {dimension_numbers = #tpu.dot_dimension_numbers<[1], [0], [0], [1], [0, 0, 1, 1], [], []>} : vector<8x4xf32>, vector<4x256xf32>, vector<8x256xf32> -> vector<8x256xf32>
    %57 = arith.addf %51, %56 : vector<8x256xf32>
    %c0_50 = arith.constant 0 : index
    %c0_51 = arith.constant 0 : index
    %58 = vector.load %arg7[%c0_50, %c0_51] : memref<8x256xf32, #tpu.memory_space<vmem>>, vector<8x256xf32>
    tpu.vector_store %arg7[%c0_50, %c0_51], %57 {strides = array<i32>} : memref<8x256xf32, #tpu.memory_space<vmem>>, vector<8x256xf32>,
    %c0_i32_52 = arith.constant 0 : i32
    %59 = arith.cmpi eq, %arg2, %c0_i32_52 : i32
    %60 = arith.extui %59 : i1 to i32
    %c0_i32_53 = arith.constant 0 : i32
    %61 = arith.cmpi ne, %60, %c0_i32_53 : i32
    scf.if %61 {
      %c0_54 = arith.constant 0 : index
      %c0_55 = arith.constant 0 : index
      %62 = vector.load %arg7[%c0_54, %c0_55] : memref<8x256xf32, #tpu.memory_space<vmem>>, vector<8x256xf32>
      %c0_56 = arith.constant 0 : index
      %c0_57 = arith.constant 0 : index
      %63 = vector.load %arg5[%c0_56, %c0_57] : memref<8x1xf32, #tpu.memory_space<vmem>>, vector<8x1xf32>
      %64 = vector.broadcast %63 : vector<8x1xf32> to vector<8x256xf32>
      %65 = arith.addf %62, %64 : vector<8x256xf32>
      %cst_58 = arith.constant 0.000000e+00 : f32
      %66 = vector.broadcast %cst_58 : f32 to vector<8x256xf32>
      %67 = arith.cmpf oge, %65, %66 : vector<8x256xf32>
      %cst_59 = arith.constant 2.000000e-01 : f32
      %68 = vector.broadcast %cst_59 : f32 to vector<8x256xf32>
      %69 = arith.mulf %68, %65 : vector<8x256xf32>
      %70 = arith.select %67, %65, %69 : vector<8x256xi1>, vector<8x256xf32>
      %c0_60 = arith.constant 0 : index
      %c0_61 = arith.constant 0 : index
      %c0_62 = arith.constant 0 : index
      %71 = vector.load %arg6[%c0_60, %c0_61, %c0_62] : memref<1x8x256xf32, #tpu.memory_space<vmem>>, vector<1x8x256xf32>
      %72 = vector.shape_cast %71 : vector<1x8x256xf32> to vector<8x256xf32>
      %73 = vector.shape_cast %70 : vector<8x256xf32> to vector<1x8x256xf32>
      tpu.vector_store %arg6[%c0_60, %c0_61, %c0_62], %73 {strides = array<i32>} : memref<1x8x256xf32, #tpu.memory_space<vmem>>, vector<1x8x256xf32>,
    } else {
    }
    return
  }
  func.func @transform_0(%arg0: i32, %arg1: i32, %arg2: i32) -> (i32, i32, i32) {
    %c0_i32 = arith.constant 0 : i32
    %c0_i32_0 = arith.constant 0 : i32
    return %arg0, %arg2, %c0_i32 : i32, i32, i32
  }
  func.func @transform_1(%arg0: i32, %arg1: i32, %arg2: i32) -> (i32, i32, i32) {
    %c0_i32 = arith.constant 0 : i32
    %c0_i32_0 = arith.constant 0 : i32
    return %c0_i32, %arg1, %arg2 : i32, i32, i32
  }
  func.func @transform_2(%arg0: i32, %arg1: i32, %arg2: i32) -> (i32, i32) {
    %c0_i32 = arith.constant 0 : i32
    %c0_i32_0 = arith.constant 0 : i32
    return %arg1, %c0_i32 : i32, i32
  }
  func.func @transform_3(%arg0: i32, %arg1: i32, %arg2: i32) -> (i32, i32, i32) {
    %c0_i32 = arith.constant 0 : i32
    %c0_i32_0 = arith.constant 0 : i32
    return %arg0, %arg1, %c0_i32 : i32, i32, i32
  }
}

</mosaic_0001>

<llo_original>
// kernel: tpu_custom_call.1
$region0: #{tpu_custom_call.1}
  #allocation0 [shape = 'u32[]', space=smem, size = 0x4, offset = 0x4, fixed_abs, tag = 'smem constant byte address 0x4 - core index']
  #allocation1 [shape = 'u32[144,128]{1,0:T(1,128)}', space=vmem, size = 0x12000, scoped, tag = 'internal scratch']
  #allocation2 [shape = 'f32[8,256]{1,0:T(8,128)}', space=vmem, size = 0x2000, scoped, tag = 'scratch operand']
  %s0 = inlined_call_operand.vmem [shape: f32[2,4,304], index: 0, kind: input, shape index: {}]
  %s1 = inlined_call_operand.vmem [shape: f32[9,8,4], index: 1, kind: input, shape index: {}]
  %s2 = inlined_call_operand.vmem [shape: f32[8,1], index: 2, kind: input, shape index: {}]
  %s3 = inlined_call_operand.hbm [shape: f32[2,8,256], index: 3, kind: output, shape index: {}]
  %s4 = sld [smem:[#allocation0]]
  $region53: #{tpu_custom_call.1} parent=0
    _
  %s6 = ssub.s32 1, %s4
  %s7 = scalar_select 0, %s6, %s4
  $region1: #{tpu_custom_call.1} parent=0
    #allocation3 [shape = 'u8[16384]{0}', space=vmem, size = 0x4000, scoped, tag = 'output window, operand 0']
    #allocation4 [shape = 's32[2]{0}', space=sflag, size = 0x8, scoped, tag = 'scoped memory for tpu_custom_call.1']
    %8 = vsyncpa [#allocation4], 0
    %s9 = scalar_lea.sflag [#allocation4], 1
    %10 = vsyncpa %s9, 0
    loop: start=0, step=1, limit=4
    $region2: #{tpu_custom_call.1} parent=1 // loop_pre_header
      _
    $region3: #{tpu_custom_call.1} parent=1 // loop_header
      %s12 = sphi 0, %s16
      %p13 = scmp.ge.s32.totalorder %s12, 4
      %s19 = sphi 0, %s38
      %s20 = sphi 0, %s34
      %s21 = sphi 0, %s30
      %s22 = sphi 0, %s19
      %s23 = sphi 0, %s20
      %s24 = sphi 0, %s21
      %s25 = sphi 0, %s22
      %s26 = sphi 0, %s23
      %s27 = sphi 0, %s24
      %s43 = sphi 0, %s45
      %s46 = sphi 0, %s43
      %s47 = sphi 0, %s46
      %s63 = sphi 0, %s47
      %s71 = sphi 0, %s73
      %s74 = sphi 0, %s71
      %s75 = sphi 0, %s74
      %s91 = sphi 0, %s75
      %s97 = sphi 0, %s99
      %s100 = sphi 0, %s97
      %s101 = sphi 0, %s100
      %s117 = sphi 0, %s101
      %s125 = sphi 0, %s127
      %s128 = sphi 0, %s125
      %s129 = sphi 0, %s128
      %s145 = sphi 0, %s129
    $region4: #{tpu_custom_call.1} parent=1 // loop_header_branch
      %15 = sbr.rel (%p13) target = $region8
    $region5: #{tpu_custom_call.1} parent=1 // loop_body
      %s17 = ssub.s32 %s12, 1
      %s18 = ssub.s32 %s12, 2
      %s28 = sadd.s32 1, %s21
      %p29 = scmp.ge.s32.totalorder %s28, 1
      %s30 = scalar_select %p29, 0, %s28
      %s31 = sadd.s32 1, %s20
      %s32 = scalar_select %p29, %s31, %s20
      %p33 = scmp.ge.s32.totalorder %s32, 1
      %s34 = scalar_select %p33, 0, %s32
      %s35 = sadd.s32 1, %s19
      %s36 = scalar_select %p33, %s35, %s19
      %p37 = scmp.ge.s32.totalorder %s36, 2
      %s38 = scalar_select %p37, 0, %s36
      %s39 = ssub.s32 %s19, %s38
      %s40 = ssub.s32 %s21, %s30
      %s41 = sor.u32 %s39, %s40
      %p42 = scmp.eq.s32.totalorder %s41, 0
      %s44 = sadd.s32 %s43, 1
      %s45 = scalar_select %p42, %s43, %s44
      %p48 = pneg %p42
      %p49 = scmp.eq.s32.totalorder %s12, 1
      %p50 = por %p48, %p49
      %p51 = scmp.ne.s32.totalorder %s43, %s46
      %p52 = scmp.eq.s32.totalorder %s12, 0
      %p53 = por %p51, %p52
      %p54 = scmp.ne.s32.totalorder %s43, %s46
      %p55 = scmp.eq.s32.totalorder %s17, 1
      %p56 = por %p54, %p55
      %p57 = scmp.ne.s32.totalorder %s46, %s47
      %p58 = scmp.eq.s32.totalorder %s17, 0
      %p59 = por %p57, %p58
      %p60 = scmp.ne.s32.totalorder %s46, %s47
      %p61 = scmp.eq.s32.totalorder %s18, 1
      %p62 = por %p60, %p61
      %p64 = scmp.ne.s32.totalorder %s47, %s63
      %p65 = scmp.eq.s32.totalorder %s18, 0
      %p66 = por %p64, %p65
      %s67 = ssub.s32 %s20, %s34
      %s68 = ssub.s32 %s21, %s30
      %s69 = sor.u32 %s67, %s68
      %p70 = scmp.eq.s32.totalorder %s69, 0
      %s72 = sadd.s32 %s71, 1
      %s73 = scalar_select %p70, %s71, %s72
      %p76 = pneg %p70
      %p77 = scmp.eq.s32.totalorder %s12, 1
      %p78 = por %p76, %p77
      %p79 = scmp.ne.s32.totalorder %s71, %s74
      %p80 = scmp.eq.s32.totalorder %s12, 0
      %p81 = por %p79, %p80
      %p82 = scmp.ne.s32.totalorder %s71, %s74
      %p83 = scmp.eq.s32.totalorder %s17, 1
      %p84 = por %p82, %p83
      %p85 = scmp.ne.s32.totalorder %s74, %s75
      %p86 = scmp.eq.s32.totalorder %s17, 0
      %p87 = por %p85, %p86
      %p88 = scmp.ne.s32.totalorder %s74, %s75
      %p89 = scmp.eq.s32.totalorder %s18, 1
      %p90 = por %p88, %p89
      %p92 = scmp.ne.s32.totalorder %s75, %s91
      %p93 = scmp.eq.s32.totalorder %s18, 0
      %p94 = por %p92, %p93
      %s95 = ssub.s32 %s20, %s34
      %p96 = scmp.eq.s32.totalorder %s95, 0
      %s98 = sadd.s32 %s97, 1
      %s99 = scalar_select %p96, %s97, %s98
      %p102 = pneg %p96
      %p103 = scmp.eq.s32.totalorder %s12, 1
      %p104 = por %p102, %p103
      %p105 = scmp.ne.s32.totalorder %s97, %s100
      %p106 = scmp.eq.s32.totalorder %s12, 0
      %p107 = por %p105, %p106
      %p108 = scmp.ne.s32.totalorder %s97, %s100
      %p109 = scmp.eq.s32.totalorder %s17, 1
      %p110 = por %p108, %p109
      %p111 = scmp.ne.s32.totalorder %s100, %s101
      %p112 = scmp.eq.s32.totalorder %s17, 0
      %p113 = por %p111, %p112
      %p114 = scmp.ne.s32.totalorder %s100, %s101
      %p115 = scmp.eq.s32.totalorder %s18, 1
      %p116 = por %p114, %p115
      %p118 = scmp.ne.s32.totalorder %s101, %s117
      %p119 = scmp.eq.s32.totalorder %s18, 0
      %p120 = por %p118, %p119
      %s121 = ssub.s32 %s19, %s38
      %s122 = ssub.s32 %s20, %s34
      %s123 = sor.u32 %s121, %s122
      %p124 = scmp.eq.s32.totalorder %s123, 0
      %s126 = sadd.s32 %s125, 1
      %s127 = scalar_select %p124, %s125, %s126
      %p130 = pneg %p124
      %p131 = scmp.eq.s32.totalorder %s12, 1
      %p132 = por %p130, %p131
      %p133 = scmp.ne.s32.totalorder %s125, %s128
      %p134 = scmp.eq.s32.totalorder %s12, 0
      %p135 = por %p133, %p134
      %p136 = scmp.ne.s32.totalorder %s125, %s128
      %p137 = scmp.eq.s32.totalorder %s17, 1
      %p138 = por %p136, %p137
      %p139 = scmp.ne.s32.totalorder %s128, %s129
      %p140 = scmp.eq.s32.totalorder %s17, 0
      %p141 = por %p139, %p140
      %p142 = scmp.ne.s32.totalorder %s128, %s129
      %p143 = scmp.eq.s32.totalorder %s18, 1
      %p144 = por %p142, %p143
      %p146 = scmp.ne.s32.totalorder %s129, %s145
      %p147 = scmp.eq.s32.totalorder %s18, 0
      %p148 = por %p146, %p147
      %p149 = scmp.le.s32.totalorder 1, %s12
      %p150 = scmp.lt.s32.totalorder %s12, 3
      %p151 = pnand %p149, %p150
      %p152 = pneg %p151
      // Predicated region
      $region9: #{tpu_custom_call.1} parent=5 // pred_check
        _
      $region10: #{tpu_custom_call.1} parent=5 // pred_check_branch
        %154 = sbr.rel (%p151) target = $region12
      $region11: #{tpu_custom_call.1} parent=5 // pred_region
        %s155 = ssub.s32 %s12, 1
        // Predicated region
        $region13: #{tpu_custom_call.1} parent=11 // pred_check
          %p156 = pneg %p87
        $region14: #{tpu_custom_call.1} parent=11 // pred_check_branch
          %158 = sbr.rel (%p156) target = $region16
        $region15: #{tpu_custom_call.1} parent=11 // pred_region
          %p159 = scmp.lt.s32.totalorder %s23, 0
          %s160 = scalar_select %p159, %s23, 0
          %p161 = scmp.lt.s32.totalorder %s24, 0
          %s162 = scalar_select %p161, %s24, 0
          %s163 = sadd.s32 %s162, %s160
          %s164 = smul.addr %s163, 8
          %s165 = scalar_lea.vmem %s1, %s164
        $region16: #{tpu_custom_call.1} parent=11 // pred_fallthru
          _
        // Predicated region
        $region17: #{tpu_custom_call.1} parent=11 // pred_check
          %p166 = pneg %p113
        $region18: #{tpu_custom_call.1} parent=11 // pred_check_branch
          %168 = sbr.rel (%p166) target = $region20
        $region19: #{tpu_custom_call.1} parent=11 // pred_region
          %p169 = scmp.lt.s32.totalorder %s23, 0
          %s170 = scalar_select %p169, %s23, 0
          %s171 = smul.addr %s170, 8
          %s172 = scalar_lea.vmem %s2, %s171
        $region20: #{tpu_custom_call.1} parent=11 // pred_fallthru
          _
      $region12: #{tpu_custom_call.1} parent=5 // pred_fallthru
        _
      %p173 = scmp.lt.s32.totalorder %s12, 2
      // Predicated region
      $region21: #{tpu_custom_call.1} parent=5 // pred_check
        %p174 = pneg %p173
      $region22: #{tpu_custom_call.1} parent=5 // pred_check_branch
        %176 = sbr.rel (%p174) target = $region24
      $region23: #{tpu_custom_call.1} parent=5 // pred_region
        // Predicated region
        $region25: #{tpu_custom_call.1} parent=23 // pred_check
          %p177 = pneg %p53
        $region26: #{tpu_custom_call.1} parent=23 // pred_check_branch
          %179 = sbr.rel (%p177) target = $region28
        $region27: #{tpu_custom_call.1} parent=23 // pred_region
          %p180 = scmp.lt.s32.totalorder %s19, 1
          %s181 = scalar_select %p180, %s19, 1
          %p182 = scmp.lt.s32.totalorder %s21, 0
          %s183 = scalar_select %p182, %s21, 0
          %s184 = smul.addr %s183, 3
          %s185 = smul.addr %s181, 3
          %s186 = sadd.s32 %s184, %s185
          %s187 = smul.addr %s186, 4
          %s188 = scalar_lea.vmem %s0, %s187
        $region28: #{tpu_custom_call.1} parent=23 // pred_fallthru
          _
      $region24: #{tpu_custom_call.1} parent=5 // pred_fallthru
        _
      %p189 = scmp.le.s32.totalorder 1, %s12
      %p190 = scmp.lt.s32.totalorder %s12, 3
      %p191 = pnand %p189, %p190
      %p192 = pneg %p191
      // Predicated region
      $region29: #{tpu_custom_call.1} parent=5 // pred_check
        _
      $region30: #{tpu_custom_call.1} parent=5 // pred_check_branch
        %194 = sbr.rel (%p191) target = $region32
      $region31: #{tpu_custom_call.1} parent=5 // pred_region
        %s195 = ssub.s32 %s12, 1
        %p196 = scmp.lt.s32.totalorder %s22, 1
        %s197 = scalar_select %p196, %s22, 1
        %p198 = scmp.lt.s32.totalorder %s24, 0
        %s199 = scalar_select %p198, %s24, 0
        %s200 = smul.addr %s199, 3
        %s201 = smul.addr %s197, 3
        %s202 = sadd.s32 %s200, %s201
        %s203 = smul.addr %s202, 4
        %s204 = scalar_lea.vmem %s0, %s203
        %p205 = pneg %p59
        %p206 = pneg %p56
        %p207 = scmp.lt.s32.totalorder %s23, 0
        %s208 = scalar_select %p207, %s23, 0
        %p209 = scmp.lt.s32.totalorder %s24, 0
        %s210 = scalar_select %p209, %s24, 0
        %s211 = sadd.s32 %s210, %s208
        %s212 = smul.addr %s211, 8
        %s213 = scalar_lea.vmem %s1, %s212
        %p214 = pneg %p87
        %p215 = pneg %p84
        %p216 = scmp.lt.s32.totalorder %s23, 0
        %s217 = scalar_select %p216, %s23, 0
        %s218 = smul.addr %s217, 8
        %s219 = scalar_lea.vmem %s2, %s218
        %p220 = pneg %p113
        %p221 = pneg %p110
        %p222 = pneg %p141
        %p223 = pneg %p138
        %s224 = sand.u32 %s128, 1
        %s225 = scalar_lea.sflag [#allocation4], %s224
        %s226 = sand.u32 %s128, 1
        %s227 = smul.addr %s226, 16
        %s228 = scalar_lea.vmem [#allocation3], %s227
        %p229 = scmp.lt.s32.totalorder %s22, 1
        %s230 = scalar_select %p229, %s22, 1
        %p231 = scmp.lt.s32.totalorder %s24, 0
        %s232 = scalar_select %p231, %s24, 0
        %s233 = smul.addr %s232, 3
        %s234 = smul.addr %s230, 3
        %s235 = sadd.s32 %s233, %s234
        %s236 = smul.addr %s235, 4
        %s237 = scalar_lea.vmem %s0, %s236
        %p238 = scmp.lt.s32.totalorder %s23, 0
        %s239 = scalar_select %p238, %s23, 0
        %p240 = scmp.lt.s32.totalorder %s24, 0
        %s241 = scalar_select %p240, %s24, 0
        %s242 = sadd.s32 %s241, %s239
        %s243 = smul.addr %s242, 8
        %s244 = scalar_lea.vmem %s1, %s243
        %p245 = scmp.lt.s32.totalorder %s23, 0
        %s246 = scalar_select %p245, %s23, 0
        %s247 = smul.addr %s246, 8
        %s248 = scalar_lea.vmem %s2, %s247
        %p249 = scmp.eq.s32.totalorder %s24, 0
        // Predicated region
        $region33: #{tpu_custom_call.1} parent=31 // pred_check
          %p250 = pneg %p249
        $region34: #{tpu_custom_call.1} parent=31 // pred_check_branch
          %252 = sbr.rel (%p250) target = $region36
        $region35: #{tpu_custom_call.1} parent=31 // pred_region
          %253 = vst [vmem:[#allocation2] sm:$0xff] 0.0
          %254 = vst [vmem:[#allocation2 + $0x8] sm:$0xff] 0.0
        $region36: #{tpu_custom_call.1} parent=31 // pred_fallthru
          _
        %v255 = vld [vmem:[#allocation2] sm:$0xff]
        %v256 = vld [vmem:[#allocation2 + $0x8] sm:$0xff]
        %v257 = vld [vmem:[%s244] sm:$0xff]
        %v258 = vld [vmem:[%s237] sm:$0xff]
        %v260 = vcombine.high %v258, %v258
        %vm261 = vcmask 31744
        %v263 = vsel %vm261, %v257, 0
        %vm265 = vcmask 1043456
        %v266 = vsel %vm265, %v258, 0
        %v268 = vsel %vm265, %v260, 0
        %270 = vmatprep.subr.mxu0 %v268
        %271 = vmatpush1.msra.mxu0 %v266
        %272 = vmatprep.subr.mxu0 0.0
        %273 = vmatpush1.msra.mxu0 0.0
        %274 = vmatprep.subr.mxu0 0.0
        %275 = vmatpush1.msra.mxu0 0.0
        %276 = vmatprep.subr.mxu0 0.0
        %277 = vmatpush1.msra.mxu0 0.0
        %278 = vmatprep.subr.mxu0 0.0
        %279 = vmatpush1.msra.mxu0 0.0
        %280 = vmatprep.subr.mxu0 0.0
        %281 = vmatpush1.msra.mxu0 0.0
        %282 = vmatprep.subr.mxu0 0.0
        %283 = vmatpush1.msra.mxu0 0.0
        %284 = vmatprep.subr.mxu0 0.0
        %285 = vmatpush1.msra.mxu0 0.0
        %286 = vmatprep.subr.mxu0 0.0
        %287 = vmatpush1.msra.mxu0 0.0
        %288 = vmatprep.subr.mxu0 0.0
        %289 = vmatpush1.msra.mxu0 0.0
        %290 = vmatprep.subr.mxu0 0.0
        %291 = vmatpush1.msra.mxu0 0.0
        %292 = vmatprep.subr.mxu0 0.0
        %293 = vmatpush1.msra.mxu0 0.0
        %294 = vmatprep.subr.mxu0 0.0
        %295 = vmatpush1.msra.mxu0 0.0
        %296 = vmatprep.subr.mxu0 0.0
        %297 = vmatpush1.msra.mxu0 0.0
        %298 = vmatprep.subr.mxu0 0.0
        %299 = vmatpush1.msra.mxu0 0.0
        %300 = vmatprep.subr.mxu0 0.0
        %301 = vmatpush1.msra.mxu0 0.0
        %302 = vmatprep.subr.mxu0 0.0
        %303 = vmatpush1.msra.mxu0 0.0
        %304 = vmatprep.subr.mxu0 0.0
        %305 = vmatpush1.msra.mxu0 0.0
        %306 = vmatprep.subr.mxu0 0.0
        %307 = vmatpush1.msra.mxu0 0.0
        %308 = vmatprep.subr.mxu0 0.0
        %309 = vmatpush1.msra.mxu0 0.0
        %310 = vmatprep.subr.mxu0 0.0
        %311 = vmatpush1.msra.mxu0 0.0
        %312 = vmatprep.subr.mxu0 0.0
        %313 = vmatpush1.msra.mxu0 0.0
        %314 = vmatprep.subr.mxu0 0.0
        %315 = vmatpush1.msra.mxu0 0.0
        %316 = vmatprep.subr.mxu0 0.0
        %317 = vmatpush1.msra.mxu0 0.0
        %318 = vmatprep.subr.mxu0 0.0
        %319 = vmatpush1.msra.mxu0 0.0
        %320 = vmatprep.subr.mxu0 0.0
        %321 = vmatpush1.msra.mxu0 0.0
        %322 = vmatprep.subr.mxu0 0.0
        %323 = vmatpush1.msra.mxu0 0.0
        %324 = vmatprep.subr.mxu0 0.0
        %325 = vmatpush1.msra.mxu0 0.0
        %326 = vmatprep.subr.mxu0 0.0
        %327 = vmatpush1.msra.mxu0 0.0
        %328 = vmatprep.subr.mxu0 0.0
        %329 = vmatpush1.msra.mxu0 0.0
        %330 = vmatprep.subr.mxu0 0.0
        %331 = vmatpush1.msra.mxu0 0.0
        %332 = vmatprep.subr.mxu0 0.0
        %333 = vmatpush1.msra.mxu0 0.0
        %334 = vmatprep.mubr.f32.mxu0 0.0
        %335 = vmatmul.mubr.f32.gmra.mrb[0].mxu0 %v263
        %v336 = vpop.f32.mrb[0].mxu0
        %v337 = vadd.f32 0.0, %v336
        %v338 = vpop.f32.mrb[0].mxu0
        %v339 = vadd.f32 0.0, %v338
        %340 = vdwg.mxu0
        %v341 = vadd.f32 %v255, %v337
        %v342 = vadd.f32 %v256, %v339
        %s343 = scalar_lea.vmem %s244, 8
        %v344 = vld [vmem:[%s343] sm:$0xff]
        %v345 = vld [vmem:[%s237] sm:$0xff]
        %v346 = vld [vmem:[%s237 + $0x8] sm:$0xf]
        %v349 = vcombine.high %v345, %v345
        %350 = vrot.lane.b32.xlu0 %v345, 127
        %v351 = vpop.permute.xlu0 %350
        %352 = vrot.lane.b32.xlu0 %v349, 127
        %v353 = vpop.permute.xlu0 %352
        %354 = vrot.lane.b32.xlu0 %v346, 127
        %v355 = vpop.permute.xlu0 %354
        %vm356 = vcmask 1039360
        %v357 = vsel %vm356, %v351, %v353
        %v358 = vsel %vm356, %v353, %v355
        %v360 = vsel %vm261, %v344, 0
        %v362 = vsel %vm265, %v357, 0
        %v364 = vsel %vm265, %v358, 0
        %366 = vmatprep.subr.mxu0 %v364
        %367 = vmatpush1.msra.mxu0 %v362
        %368 = vmatprep.subr.mxu0 0.0
        %369 = vmatpush1.msra.mxu0 0.0
        %370 = vmatprep.subr.mxu0 0.0
        %371 = vmatpush1.msra.mxu0 0.0
        %372 = vmatprep.subr.mxu0 0.0
        %373 = vmatpush1.msra.mxu0 0.0
        %374 = vmatprep.subr.mxu0 0.0
        %375 = vmatpush1.msra.mxu0 0.0
        %376 = vmatprep.subr.mxu0 0.0
        %377 = vmatpush1.msra.mxu0 0.0
        %378 = vmatprep.subr.mxu0 0.0
        %379 = vmatpush1.msra.mxu0 0.0
        %380 = vmatprep.subr.mxu0 0.0
        %381 = vmatpush1.msra.mxu0 0.0
        %382 = vmatprep.subr.mxu0 0.0
        %383 = vmatpush1.msra.mxu0 0.0
        %384 = vmatprep.subr.mxu0 0.0
        %385 = vmatpush1.msra.mxu0 0.0
        %386 = vmatprep.subr.mxu0 0.0
        %387 = vmatpush1.msra.mxu0 0.0
        %388 = vmatprep.subr.mxu0 0.0
        %389 = vmatpush1.msra.mxu0 0.0
        %390 = vmatprep.subr.mxu0 0.0
        %391 = vmatpush1.msra.mxu0 0.0
        %392 = vmatprep.subr.mxu0 0.0
        %393 = vmatpush1.msra.mxu0 0.0
        %394 = vmatprep.subr.mxu0 0.0
        %395 = vmatpush1.msra.mxu0 0.0
        %396 = vmatprep.subr.mxu0 0.0
        %397 = vmatpush1.msra.mxu0 0.0
        %398 = vmatprep.subr.mxu0 0.0
        %399 = vmatpush1.msra.mxu0 0.0
        %400 = vmatprep.subr.mxu0 0.0
        %401 = vmatpush1.msra.mxu0 0.0
        %402 = vmatprep.subr.mxu0 0.0
        %403 = vmatpush1.msra.mxu0 0.0
        %404 = vmatprep.subr.mxu0 0.0
        %405 = vmatpush1.msra.mxu0 0.0
        %406 = vmatprep.subr.mxu0 0.0
        %407 = vmatpush1.msra.mxu0 0.0
        %408 = vmatprep.subr.mxu0 0.0
        %409 = vmatpush1.msra.mxu0 0.0
        %410 = vmatprep.subr.mxu0 0.0
        %411 = vmatpush1.msra.mxu0 0.0
        %412 = vmatprep.subr.mxu0 0.0
        %413 = vmatpush1.msra.mxu0 0.0
        %414 = vmatprep.subr.mxu0 0.0
        %415 = vmatpush1.msra.mxu0 0.0
        %416 = vmatprep.subr.mxu0 0.0
        %417 = vmatpush1.msra.mxu0 0.0
        %418 = vmatprep.subr.mxu0 0.0
        %419 = vmatpush1.msra.mxu0 0.0
        %420 = vmatprep.subr.mxu0 0.0
        %421 = vmatpush1.msra.mxu0 0.0
        %422 = vmatprep.subr.mxu0 0.0
        %423 = vmatpush1.msra.mxu0 0.0
        %424 = vmatprep.subr.mxu0 0.0
        %425 = vmatpush1.msra.mxu0 0.0
        %426 = vmatprep.subr.mxu0 0.0
        %427 = vmatpush1.msra.mxu0 0.0
        %428 = vmatprep.subr.mxu0 0.0
        %429 = vmatpush1.msra.mxu0 0.0
        %430 = vmatprep.mubr.f32.mxu0 0.0
        %431 = vmatmul.mubr.f32.gmra.mrb[0].mxu0 %v360
        %v432 = vpop.f32.mrb[0].mxu0
        %v433 = vadd.f32 0.0, %v432
        %v434 = vpop.f32.mrb[0].mxu0
        %v435 = vadd.f32 0.0, %v434
        %436 = vdwg.mxu0
        %v437 = vadd.f32 %v341, %v433
        %v438 = vadd.f32 %v342, %v435
        %s439 = scalar_lea.vmem %s244, 16
        %v440 = vld [vmem:[%s439] sm:$0xff]
        %v441 = vld [vmem:[%s237] sm:$0xff]
        %v442 = vld [vmem:[%s237 + $0x8] sm:$0xf]
        %v445 = vcombine.high %v441, %v441
        %446 = vrot.lane.b32.xlu0 %v441, 126
        %v447 = vpop.permute.xlu0 %446
        %448 = vrot.lane.b32.xlu0 %v445, 126
        %v449 = vpop.permute.xlu0 %448
        %450 = vrot.lane.b32.xlu0 %v442, 126
        %v451 = vpop.permute.xlu0 %450
        %vm452 = vcmask 1031168
        %v453 = vsel %vm452, %v447, %v449
        %v454 = vsel %vm452, %v449, %v451
        %v456 = vsel %vm261, %v440, 0
        %v458 = vsel %vm265, %v453, 0
        %v460 = vsel %vm265, %v454, 0
        %462 = vmatprep.subr.mxu0 %v460
        %463 = vmatpush1.msra.mxu0 %v458
        %464 = vmatprep.subr.mxu0 0.0
        %465 = vmatpush1.msra.mxu0 0.0
        %466 = vmatprep.subr.mxu0 0.0
        %467 = vmatpush1.msra.mxu0 0.0
        %468 = vmatprep.subr.mxu0 0.0
        %469 = vmatpush1.msra.mxu0 0.0
        %470 = vmatprep.subr.mxu0 0.0
        %471 = vmatpush1.msra.mxu0 0.0
        %472 = vmatprep.subr.mxu0 0.0
        %473 = vmatpush1.msra.mxu0 0.0
        %474 = vmatprep.subr.mxu0 0.0
        %475 = vmatpush1.msra.mxu0 0.0
        %476 = vmatprep.subr.mxu0 0.0
        %477 = vmatpush1.msra.mxu0 0.0
        %478 = vmatprep.subr.mxu0 0.0
        %479 = vmatpush1.msra.mxu0 0.0
        %480 = vmatprep.subr.mxu0 0.0
        %481 = vmatpush1.msra.mxu0 0.0
        %482 = vmatprep.subr.mxu0 0.0
        %483 = vmatpush1.msra.mxu0 0.0
        %484 = vmatprep.subr.mxu0 0.0
        %485 = vmatpush1.msra.mxu0 0.0
        %486 = vmatprep.subr.mxu0 0.0
        %487 = vmatpush1.msra.mxu0 0.0
        %488 = vmatprep.subr.mxu0 0.0
        %489 = vmatpush1.msra.mxu0 0.0
        %490 = vmatprep.subr.mxu0 0.0
        %491 = vmatpush1.msra.mxu0 0.0
        %492 = vmatprep.subr.mxu0 0.0
        %493 = vmatpush1.msra.mxu0 0.0
        %494 = vmatprep.subr.mxu0 0.0
        %495 = vmatpush1.msra.mxu0 0.0
        %496 = vmatprep.subr.mxu0 0.0
        %497 = vmatpush1.msra.mxu0 0.0
        %498 = vmatprep.subr.mxu0 0.0
        %499 = vmatpush1.msra.mxu0 0.0
        %500 = vmatprep.subr.mxu0 0.0
        %501 = vmatpush1.msra.mxu0 0.0
        %502 = vmatprep.subr.mxu0 0.0
        %503 = vmatpush1.msra.mxu0 0.0
        %504 = vmatprep.subr.mxu0 0.0
        %505 = vmatpush1.msra.mxu0 0.0
        %506 = vmatprep.subr.mxu0 0.0
        %507 = vmatpush1.msra.mxu0 0.0
        %508 = vmatprep.subr.mxu0 0.0
        %509 = vmatpush1.msra.mxu0 0.0
        %510 = vmatprep.subr.mxu0 0.0
        %511 = vmatpush1.msra.mxu0 0.0
        %512 = vmatprep.subr.mxu0 0.0
        %513 = vmatpush1.msra.mxu0 0.0
        %514 = vmatprep.subr.mxu0 0.0
        %515 = vmatpush1.msra.mxu0 0.0
        %516 = vmatprep.subr.mxu0 0.0
        %517 = vmatpush1.msra.mxu0 0.0
        %518 = vmatprep.subr.mxu0 0.0
        %519 = vmatpush1.msra.mxu0 0.0
        %520 = vmatprep.subr.mxu0 0.0
        %521 = vmatpush1.msra.mxu0 0.0
        %522 = vmatprep.subr.mxu0 0.0
        %523 = vmatpush1.msra.mxu0 0.0
        %524 = vmatprep.subr.mxu0 0.0
        %525 = vmatpush1.msra.mxu0 0.0
        %526 = vmatprep.mubr.f32.mxu0 0.0
        %527 = vmatmul.mubr.f32.gmra.mrb[0].mxu0 %v456
        %v528 = vpop.f32.mrb[0].mxu0
        %v529 = vadd.f32 0.0, %v528
        %v530 = vpop.f32.mrb[0].mxu0
        %v531 = vadd.f32 0.0, %v530
        %532 = vdwg.mxu0
        %v533 = vadd.f32 %v437, %v529
        %v534 = vadd.f32 %v438, %v531
        %s535 = scalar_lea.vmem %s244, 24
        %v536 = vld [vmem:[%s535] sm:$0xff]
        %v537 = vld [vmem:[%s237] sm:$0xff]
        %v538 = vld [vmem:[%s237 + $0x8] sm:$0xf]
        %v541 = vcombine.high %v537, %v537
        %542 = vrot.lane.b32.xlu0 %v537, 112
        %v543 = vpop.permute.xlu0 %542
        %544 = vrot.lane.b32.xlu0 %v541, 112
        %v545 = vpop.permute.xlu0 %544
        %546 = vrot.lane.b32.xlu0 %v538, 112
        %v547 = vpop.permute.xlu0 %546
        %vm548 = vcmask 916480
        %v549 = vsel %vm548, %v543, %v545
        %v550 = vsel %vm548, %v545, %v547
        %v552 = vsel %vm261, %v536, 0
        %v554 = vsel %vm265, %v549, 0
        %v556 = vsel %vm265, %v550, 0
        %558 = vmatprep.subr.mxu0 %v556
        %559 = vmatpush1.msra.mxu0 %v554
        %560 = vmatprep.subr.mxu0 0.0
        %561 = vmatpush1.msra.mxu0 0.0
        %562 = vmatprep.subr.mxu0 0.0
        %563 = vmatpush1.msra.mxu0 0.0
        %564 = vmatprep.subr.mxu0 0.0
        %565 = vmatpush1.msra.mxu0 0.0
        %566 = vmatprep.subr.mxu0 0.0
        %567 = vmatpush1.msra.mxu0 0.0
        %568 = vmatprep.subr.mxu0 0.0
        %569 = vmatpush1.msra.mxu0 0.0
        %570 = vmatprep.subr.mxu0 0.0
        %571 = vmatpush1.msra.mxu0 0.0
        %572 = vmatprep.subr.mxu0 0.0
        %573 = vmatpush1.msra.mxu0 0.0
        %574 = vmatprep.subr.mxu0 0.0
        %575 = vmatpush1.msra.mxu0 0.0
        %576 = vmatprep.subr.mxu0 0.0
        %577 = vmatpush1.msra.mxu0 0.0
        %578 = vmatprep.subr.mxu0 0.0
        %579 = vmatpush1.msra.mxu0 0.0
        %580 = vmatprep.subr.mxu0 0.0
        %581 = vmatpush1.msra.mxu0 0.0
        %582 = vmatprep.subr.mxu0 0.0
        %583 = vmatpush1.msra.mxu0 0.0
        %584 = vmatprep.subr.mxu0 0.0
        %585 = vmatpush1.msra.mxu0 0.0
        %586 = vmatprep.subr.mxu0 0.0
        %587 = vmatpush1.msra.mxu0 0.0
        %588 = vmatprep.subr.mxu0 0.0
        %589 = vmatpush1.msra.mxu0 0.0
        %590 = vmatprep.subr.mxu0 0.0
        %591 = vmatpush1.msra.mxu0 0.0
        %592 = vmatprep.subr.mxu0 0.0
        %593 = vmatpush1.msra.mxu0 0.0
        %594 = vmatprep.subr.mxu0 0.0
        %595 = vmatpush1.msra.mxu0 0.0
        %596 = vmatprep.subr.mxu0 0.0
        %597 = vmatpush1.msra.mxu0 0.0
        %598 = vmatprep.subr.mxu0 0.0
        %599 = vmatpush1.msra.mxu0 0.0
        %600 = vmatprep.subr.mxu0 0.0
        %601 = vmatpush1.msra.mxu0 0.0
        %602 = vmatprep.subr.mxu0 0.0
        %603 = vmatpush1.msra.mxu0 0.0
        %604 = vmatprep.subr.mxu0 0.0
        %605 = vmatpush1.msra.mxu0 0.0
        %606 = vmatprep.subr.mxu0 0.0
        %607 = vmatpush1.msra.mxu0 0.0
        %608 = vmatprep.subr.mxu0 0.0
        %609 = vmatpush1.msra.mxu0 0.0
        %610 = vmatprep.subr.mxu0 0.0
        %611 = vmatpush1.msra.mxu0 0.0
        %612 = vmatprep.subr.mxu0 0.0
        %613 = vmatpush1.msra.mxu0 0.0
        %614 = vmatprep.subr.mxu0 0.0
        %615 = vmatpush1.msra.mxu0 0.0
        %616 = vmatprep.subr.mxu0 0.0
        %617 = vmatpush1.msra.mxu0 0.0
        %618 = vmatprep.subr.mxu0 0.0
        %619 = vmatpush1.msra.mxu0 0.0
        %620 = vmatprep.subr.mxu0 0.0
        %621 = vmatpush1.msra.mxu0 0.0
        %622 = vmatprep.mubr.f32.mxu0 0.0
        %623 = vmatmul.mubr.f32.gmra.mrb[0].mxu0 %v552
        %v624 = vpop.f32.mrb[0].mxu0
        %v625 = vadd.f32 0.0, %v624
        %v626 = vpop.f32.mrb[0].mxu0
        %v627 = vadd.f32 0.0, %v626
        %628 = vdwg.mxu0
        %v629 = vadd.f32 %v533, %v625
        %v630 = vadd.f32 %v534, %v627
        %s631 = scalar_lea.vmem %s244, 32
        %v632 = vld [vmem:[%s631] sm:$0xff]
        %v633 = vld [vmem:[%s237] sm:$0xff]
        %v634 = vld [vmem:[%s237 + $0x8] sm:$0xf]
        %v637 = vcombine.high %v633, %v633
        %638 = vrot.lane.b32.xlu0 %v633, 111
        %v639 = vpop.permute.xlu0 %638
        %640 = vrot.lane.b32.xlu0 %v637, 111
        %v641 = vpop.permute.xlu0 %640
        %642 = vrot.lane.b32.xlu0 %v634, 111
        %v643 = vpop.permute.xlu0 %642
        %vm644 = vcmask 908288
        %v645 = vsel %vm644, %v639, %v641
        %v646 = vsel %vm644, %v641, %v643
        %v648 = vsel %vm261, %v632, 0
        %v650 = vsel %vm265, %v645, 0
        %v652 = vsel %vm265, %v646, 0
        %654 = vmatprep.subr.mxu0 %v652
        %655 = vmatpush1.msra.mxu0 %v650
        %656 = vmatprep.subr.mxu0 0.0
        %657 = vmatpush1.msra.mxu0 0.0
        %658 = vmatprep.subr.mxu0 0.0
        %659 = vmatpush1.msra.mxu0 0.0
        %660 = vmatprep.subr.mxu0 0.0
        %661 = vmatpush1.msra.mxu0 0.0
        %662 = vmatprep.subr.mxu0 0.0
        %663 = vmatpush1.msra.mxu0 0.0
        %664 = vmatprep.subr.mxu0 0.0
        %665 = vmatpush1.msra.mxu0 0.0
        %666 = vmatprep.subr.mxu0 0.0
        %667 = vmatpush1.msra.mxu0 0.0
        %668 = vmatprep.subr.mxu0 0.0
        %669 = vmatpush1.msra.mxu0 0.0
        %670 = vmatprep.subr.mxu0 0.0
        %671 = vmatpush1.msra.mxu0 0.0
        %672 = vmatprep.subr.mxu0 0.0
        %673 = vmatpush1.msra.mxu0 0.0
        %674 = vmatprep.subr.mxu0 0.0
        %675 = vmatpush1.msra.mxu0 0.0
        %676 = vmatprep.subr.mxu0 0.0
        %677 = vmatpush1.msra.mxu0 0.0
        %678 = vmatprep.subr.mxu0 0.0
        %679 = vmatpush1.msra.mxu0 0.0
        %680 = vmatprep.subr.mxu0 0.0
        %681 = vmatpush1.msra.mxu0 0.0
        %682 = vmatprep.subr.mxu0 0.0
        %683 = vmatpush1.msra.mxu0 0.0
        %684 = vmatprep.subr.mxu0 0.0
        %685 = vmatpush1.msra.mxu0 0.0
        %686 = vmatprep.subr.mxu0 0.0
        %687 = vmatpush1.msra.mxu0 0.0
        %688 = vmatprep.subr.mxu0 0.0
        %689 = vmatpush1.msra.mxu0 0.0
        %690 = vmatprep.subr.mxu0 0.0
        %691 = vmatpush1.msra.mxu0 0.0
        %692 = vmatprep.subr.mxu0 0.0
        %693 = vmatpush1.msra.mxu0 0.0
        %694 = vmatprep.subr.mxu0 0.0
        %695 = vmatpush1.msra.mxu0 0.0
        %696 = vmatprep.subr.mxu0 0.0
        %697 = vmatpush1.msra.mxu0 0.0
        %698 = vmatprep.subr.mxu0 0.0
        %699 = vmatpush1.msra.mxu0 0.0
        %700 = vmatprep.subr.mxu0 0.0
        %701 = vmatpush1.msra.mxu0 0.0
        %702 = vmatprep.subr.mxu0 0.0
        %703 = vmatpush1.msra.mxu0 0.0
        %704 = vmatprep.subr.mxu0 0.0
        %705 = vmatpush1.msra.mxu0 0.0
        %706 = vmatprep.subr.mxu0 0.0
        %707 = vmatpush1.msra.mxu0 0.0
        %708 = vmatprep.subr.mxu0 0.0
        %709 = vmatpush1.msra.mxu0 0.0
        %710 = vmatprep.subr.mxu0 0.0
        %711 = vmatpush1.msra.mxu0 0.0
        %712 = vmatprep.subr.mxu0 0.0
        %713 = vmatpush1.msra.mxu0 0.0
        %714 = vmatprep.subr.mxu0 0.0
        %715 = vmatpush1.msra.mxu0 0.0
        %716 = vmatprep.subr.mxu0 0.0
        %717 = vmatpush1.msra.mxu0 0.0
        %718 = vmatprep.mubr.f32.mxu0 0.0
        %719 = vmatmul.mubr.f32.gmra.mrb[0].mxu0 %v648
        %v720 = vpop.f32.mrb[0].mxu0
        %v721 = vadd.f32 0.0, %v720
        %v722 = vpop.f32.mrb[0].mxu0
        %v723 = vadd.f32 0.0, %v722
        %724 = vdwg.mxu0
        %v725 = vadd.f32 %v629, %v721
        %v726 = vadd.f32 %v630, %v723
        %s727 = scalar_lea.vmem %s244, 40
        %v728 = vld [vmem:[%s727] sm:$0xff]
        %v729 = vld [vmem:[%s237] sm:$0xff]
        %v730 = vld [vmem:[%s237 + $0x8] sm:$0xf]
        %v733 = vcombine.high %v729, %v729
        %734 = vrot.lane.b32.xlu0 %v729, 110
        %v735 = vpop.permute.xlu0 %734
        %736 = vrot.lane.b32.xlu0 %v733, 110
        %v737 = vpop.permute.xlu0 %736
        %738 = vrot.lane.b32.xlu0 %v730, 110
        %v739 = vpop.permute.xlu0 %738
        %vm740 = vcmask 900096
        %v741 = vsel %vm740, %v735, %v737
        %v742 = vsel %vm740, %v737, %v739
        %v744 = vsel %vm261, %v728, 0
        %v746 = vsel %vm265, %v741, 0
        %v748 = vsel %vm265, %v742, 0
        %750 = vmatprep.subr.mxu0 %v748
        %751 = vmatpush1.msra.mxu0 %v746
        %752 = vmatprep.subr.mxu0 0.0
        %753 = vmatpush1.msra.mxu0 0.0
        %754 = vmatprep.subr.mxu0 0.0
        %755 = vmatpush1.msra.mxu0 0.0
        %756 = vmatprep.subr.mxu0 0.0
        %757 = vmatpush1.msra.mxu0 0.0
        %758 = vmatprep.subr.mxu0 0.0
        %759 = vmatpush1.msra.mxu0 0.0
        %760 = vmatprep.subr.mxu0 0.0
        %761 = vmatpush1.msra.mxu0 0.0
        %762 = vmatprep.subr.mxu0 0.0
        %763 = vmatpush1.msra.mxu0 0.0
        %764 = vmatprep.subr.mxu0 0.0
        %765 = vmatpush1.msra.mxu0 0.0
        %766 = vmatprep.subr.mxu0 0.0
        %767 = vmatpush1.msra.mxu0 0.0
        %768 = vmatprep.subr.mxu0 0.0
        %769 = vmatpush1.msra.mxu0 0.0
        %770 = vmatprep.subr.mxu0 0.0
        %771 = vmatpush1.msra.mxu0 0.0
        %772 = vmatprep.subr.mxu0 0.0
        %773 = vmatpush1.msra.mxu0 0.0
        %774 = vmatprep.subr.mxu0 0.0
        %775 = vmatpush1.msra.mxu0 0.0
        %776 = vmatprep.subr.mxu0 0.0
        %777 = vmatpush1.msra.mxu0 0.0
        %778 = vmatprep.subr.mxu0 0.0
        %779 = vmatpush1.msra.mxu0 0.0
        %780 = vmatprep.subr.mxu0 0.0
        %781 = vmatpush1.msra.mxu0 0.0
        %782 = vmatprep.subr.mxu0 0.0
        %783 = vmatpush1.msra.mxu0 0.0
        %784 = vmatprep.subr.mxu0 0.0
        %785 = vmatpush1.msra.mxu0 0.0
        %786 = vmatprep.subr.mxu0 0.0
        %787 = vmatpush1.msra.mxu0 0.0
        %788 = vmatprep.subr.mxu0 0.0
        %789 = vmatpush1.msra.mxu0 0.0
        %790 = vmatprep.subr.mxu0 0.0
        %791 = vmatpush1.msra.mxu0 0.0
        %792 = vmatprep.subr.mxu0 0.0
        %793 = vmatpush1.msra.mxu0 0.0
        %794 = vmatprep.subr.mxu0 0.0
        %795 = vmatpush1.msra.mxu0 0.0
        %796 = vmatprep.subr.mxu0 0.0
        %797 = vmatpush1.msra.mxu0 0.0
        %798 = vmatprep.subr.mxu0 0.0
        %799 = vmatpush1.msra.mxu0 0.0
        %800 = vmatprep.subr.mxu0 0.0
        %801 = vmatpush1.msra.mxu0 0.0
        %802 = vmatprep.subr.mxu0 0.0
        %803 = vmatpush1.msra.mxu0 0.0
        %804 = vmatprep.subr.mxu0 0.0
        %805 = vmatpush1.msra.mxu0 0.0
        %806 = vmatprep.subr.mxu0 0.0
        %807 = vmatpush1.msra.mxu0 0.0
        %808 = vmatprep.subr.mxu0 0.0
        %809 = vmatpush1.msra.mxu0 0.0
        %810 = vmatprep.subr.mxu0 0.0
        %811 = vmatpush1.msra.mxu0 0.0
        %812 = vmatprep.subr.mxu0 0.0
        %813 = vmatpush1.msra.mxu0 0.0
        %814 = vmatprep.mubr.f32.mxu0 0.0
        %815 = vmatmul.mubr.f32.gmra.mrb[0].mxu0 %v744
        %v816 = vpop.f32.mrb[0].mxu0
        %v817 = vadd.f32 0.0, %v816
        %v818 = vpop.f32.mrb[0].mxu0
        %v819 = vadd.f32 0.0, %v818
        %820 = vdwg.mxu0
        %v821 = vadd.f32 %v725, %v817
        %v822 = vadd.f32 %v726, %v819
        %s823 = scalar_lea.vmem %s244, 48
        %v824 = vld [vmem:[%s823] sm:$0xff]
        %v825 = vld [vmem:[%s237] sm:$0xff]
        %v826 = vld [vmem:[%s237 + $0x8] sm:$0xf]
        %v829 = vcombine.high %v825, %v825
        %830 = vrot.lane.b32.xlu0 %v825, 96
        %v831 = vpop.permute.xlu0 %830
        %832 = vrot.lane.b32.xlu0 %v829, 96
        %v833 = vpop.permute.xlu0 %832
        %834 = vrot.lane.b32.xlu0 %v826, 96
        %v835 = vpop.permute.xlu0 %834
        %vm836 = vcmask 785408
        %v837 = vsel %vm836, %v831, %v833
        %v838 = vsel %vm836, %v833, %v835
        %v840 = vsel %vm261, %v824, 0
        %v842 = vsel %vm265, %v837, 0
        %v844 = vsel %vm265, %v838, 0
        %846 = vmatprep.subr.mxu0 %v844
        %847 = vmatpush1.msra.mxu0 %v842
        %848 = vmatprep.subr.mxu0 0.0
        %849 = vmatpush1.msra.mxu0 0.0
        %850 = vmatprep.subr.mxu0 0.0
        %851 = vmatpush1.msra.mxu0 0.0
        %852 = vmatprep.subr.mxu0 0.0
        %853 = vmatpush1.msra.mxu0 0.0
        %854 = vmatprep.subr.mxu0 0.0
        %855 = vmatpush1.msra.mxu0 0.0
        %856 = vmatprep.subr.mxu0 0.0
        %857 = vmatpush1.msra.mxu0 0.0
        %858 = vmatprep.subr.mxu0 0.0
        %859 = vmatpush1.msra.mxu0 0.0
        %860 = vmatprep.subr.mxu0 0.0
        %861 = vmatpush1.msra.mxu0 0.0
        %862 = vmatprep.subr.mxu0 0.0
        %863 = vmatpush1.msra.mxu0 0.0
        %864 = vmatprep.subr.mxu0 0.0
        %865 = vmatpush1.msra.mxu0 0.0
        %866 = vmatprep.subr.mxu0 0.0
        %867 = vmatpush1.msra.mxu0 0.0
        %868 = vmatprep.subr.mxu0 0.0
        %869 = vmatpush1.msra.mxu0 0.0
        %870 = vmatprep.subr.mxu0 0.0
        %871 = vmatpush1.msra.mxu0 0.0
        %872 = vmatprep.subr.mxu0 0.0
        %873 = vmatpush1.msra.mxu0 0.0
        %874 = vmatprep.subr.mxu0 0.0
        %875 = vmatpush1.msra.mxu0 0.0
        %876 = vmatprep.subr.mxu0 0.0
        %877 = vmatpush1.msra.mxu0 0.0
        %878 = vmatprep.subr.mxu0 0.0
        %879 = vmatpush1.msra.mxu0 0.0
        %880 = vmatprep.subr.mxu0 0.0
        %881 = vmatpush1.msra.mxu0 0.0
        %882 = vmatprep.subr.mxu0 0.0
        %883 = vmatpush1.msra.mxu0 0.0
        %884 = vmatprep.subr.mxu0 0.0
        %885 = vmatpush1.msra.mxu0 0.0
        %886 = vmatprep.subr.mxu0 0.0
        %887 = vmatpush1.msra.mxu0 0.0
        %888 = vmatprep.subr.mxu0 0.0
        %889 = vmatpush1.msra.mxu0 0.0
        %890 = vmatprep.subr.mxu0 0.0
        %891 = vmatpush1.msra.mxu0 0.0
        %892 = vmatprep.subr.mxu0 0.0
        %893 = vmatpush1.msra.mxu0 0.0
        %894 = vmatprep.subr.mxu0 0.0
        %895 = vmatpush1.msra.mxu0 0.0
        %896 = vmatprep.subr.mxu0 0.0
        %897 = vmatpush1.msra.mxu0 0.0
        %898 = vmatprep.subr.mxu0 0.0
        %899 = vmatpush1.msra.mxu0 0.0
        %900 = vmatprep.subr.mxu0 0.0
        %901 = vmatpush1.msra.mxu0 0.0
        %902 = vmatprep.subr.mxu0 0.0
        %903 = vmatpush1.msra.mxu0 0.0
        %904 = vmatprep.subr.mxu0 0.0
        %905 = vmatpush1.msra.mxu0 0.0
        %906 = vmatprep.subr.mxu0 0.0
        %907 = vmatpush1.msra.mxu0 0.0
        %908 = vmatprep.subr.mxu0 0.0
        %909 = vmatpush1.msra.mxu0 0.0
        %910 = vmatprep.mubr.f32.mxu0 0.0
        %911 = vmatmul.mubr.f32.gmra.mrb[0].mxu0 %v840
        %v912 = vpop.f32.mrb[0].mxu0
        %v913 = vadd.f32 0.0, %v912
        %v914 = vpop.f32.mrb[0].mxu0
        %v915 = vadd.f32 0.0, %v914
        %916 = vdwg.mxu0
        %v917 = vadd.f32 %v821, %v913
        %v918 = vadd.f32 %v822, %v915
        %s919 = scalar_lea.vmem %s244, 56
        %v920 = vld [vmem:[%s919] sm:$0xff]
        %v921 = vld [vmem:[%s237] sm:$0xff]
        %v922 = vld [vmem:[%s237 + $0x8] sm:$0xf]
        %v925 = vcombine.high %v921, %v921
        %926 = vrot.lane.b32.xlu0 %v921, 95
        %v927 = vpop.permute.xlu0 %926
        %928 = vrot.lane.b32.xlu0 %v925, 95
        %v929 = vpop.permute.xlu0 %928
        %930 = vrot.lane.b32.xlu0 %v922, 95
        %v931 = vpop.permute.xlu0 %930
        %vm932 = vcmask 777216
        %v933 = vsel %vm932, %v927, %v929
        %v934 = vsel %vm932, %v929, %v931
        %v936 = vsel %vm261, %v920, 0
        %v938 = vsel %vm265, %v933, 0
        %v940 = vsel %vm265, %v934, 0
        %942 = vmatprep.subr.mxu0 %v940
        %943 = vmatpush1.msra.mxu0 %v938
        %944 = vmatprep.subr.mxu0 0.0
        %945 = vmatpush1.msra.mxu0 0.0
        %946 = vmatprep.subr.mxu0 0.0
        %947 = vmatpush1.msra.mxu0 0.0
        %948 = vmatprep.subr.mxu0 0.0
        %949 = vmatpush1.msra.mxu0 0.0
        %950 = vmatprep.subr.mxu0 0.0
        %951 = vmatpush1.msra.mxu0 0.0
        %952 = vmatprep.subr.mxu0 0.0
        %953 = vmatpush1.msra.mxu0 0.0
        %954 = vmatprep.subr.mxu0 0.0
        %955 = vmatpush1.msra.mxu0 0.0
        %956 = vmatprep.subr.mxu0 0.0
        %957 = vmatpush1.msra.mxu0 0.0
        %958 = vmatprep.subr.mxu0 0.0
        %959 = vmatpush1.msra.mxu0 0.0
        %960 = vmatprep.subr.mxu0 0.0
        %961 = vmatpush1.msra.mxu0 0.0
        %962 = vmatprep.subr.mxu0 0.0
        %963 = vmatpush1.msra.mxu0 0.0
        %964 = vmatprep.subr.mxu0 0.0
        %965 = vmatpush1.msra.mxu0 0.0
        %966 = vmatprep.subr.mxu0 0.0
        %967 = vmatpush1.msra.mxu0 0.0
        %968 = vmatprep.subr.mxu0 0.0
        %969 = vmatpush1.msra.mxu0 0.0
        %970 = vmatprep.subr.mxu0 0.0
        %971 = vmatpush1.msra.mxu0 0.0
        %972 = vmatprep.subr.mxu0 0.0
        %973 = vmatpush1.msra.mxu0 0.0
        %974 = vmatprep.subr.mxu0 0.0
        %975 = vmatpush1.msra.mxu0 0.0
        %976 = vmatprep.subr.mxu0 0.0
        %977 = vmatpush1.msra.mxu0 0.0
        %978 = vmatprep.subr.mxu0 0.0
        %979 = vmatpush1.msra.mxu0 0.0
        %980 = vmatprep.subr.mxu0 0.0
        %981 = vmatpush1.msra.mxu0 0.0
        %982 = vmatprep.subr.mxu0 0.0
        %983 = vmatpush1.msra.mxu0 0.0
        %984 = vmatprep.subr.mxu0 0.0
        %985 = vmatpush1.msra.mxu0 0.0
        %986 = vmatprep.subr.mxu0 0.0
        %987 = vmatpush1.msra.mxu0 0.0
        %988 = vmatprep.subr.mxu0 0.0
        %989 = vmatpush1.msra.mxu0 0.0
        %990 = vmatprep.subr.mxu0 0.0
        %991 = vmatpush1.msra.mxu0 0.0
        %992 = vmatprep.subr.mxu0 0.0
        %993 = vmatpush1.msra.mxu0 0.0
        %994 = vmatprep.subr.mxu0 0.0
        %995 = vmatpush1.msra.mxu0 0.0
        %996 = vmatprep.subr.mxu0 0.0
        %997 = vmatpush1.msra.mxu0 0.0
        %998 = vmatprep.subr.mxu0 0.0
        %999 = vmatpush1.msra.mxu0 0.0
        %1000 = vmatprep.subr.mxu0 0.0
        %1001 = vmatpush1.msra.mxu0 0.0
        %1002 = vmatprep.subr.mxu0 0.0
        %1003 = vmatpush1.msra.mxu0 0.0
        %1004 = vmatprep.subr.mxu0 0.0
        %1005 = vmatpush1.msra.mxu0 0.0
        %1006 = vmatprep.mubr.f32.mxu0 0.0
        %1007 = vmatmul.mubr.f32.gmra.mrb[0].mxu0 %v936
        %v1008 = vpop.f32.mrb[0].mxu0
        %v1009 = vadd.f32 0.0, %v1008
        %v1010 = vpop.f32.mrb[0].mxu0
        %v1011 = vadd.f32 0.0, %v1010
        %1012 = vdwg.mxu0
        %v1013 = vadd.f32 %v917, %v1009
        %v1014 = vadd.f32 %v918, %v1011
        %s1015 = scalar_lea.vmem %s244, 64
        %v1016 = vld [vmem:[%s1015] sm:$0xff]
        %v1017 = vld [vmem:[%s237] sm:$0xff]
        %v1018 = vld [vmem:[%s237 + $0x8] sm:$0xf]
        %v1021 = vcombine.high %v1017, %v1017
        %1022 = vrot.lane.b32.xlu0 %v1017, 94
        %v1023 = vpop.permute.xlu0 %1022
        %1024 = vrot.lane.b32.xlu0 %v1021, 94
        %v1025 = vpop.permute.xlu0 %1024
        %1026 = vrot.lane.b32.xlu0 %v1018, 94
        %v1027 = vpop.permute.xlu0 %1026
        %vm1028 = vcmask 769024
        %v1029 = vsel %vm1028, %v1023, %v1025
        %v1030 = vsel %vm1028, %v1025, %v1027
        %v1032 = vsel %vm261, %v1016, 0
        %v1034 = vsel %vm265, %v1029, 0
        %v1036 = vsel %vm265, %v1030, 0
        %1038 = vmatprep.subr.mxu0 %v1036
        %1039 = vmatpush1.msra.mxu0 %v1034
        %1040 = vmatprep.subr.mxu0 0.0
        %1041 = vmatpush1.msra.mxu0 0.0
        %1042 = vmatprep.subr.mxu0 0.0
        %1043 = vmatpush1.msra.mxu0 0.0
        %1044 = vmatprep.subr.mxu0 0.0
        %1045 = vmatpush1.msra.mxu0 0.0
        %1046 = vmatprep.subr.mxu0 0.0
        %1047 = vmatpush1.msra.mxu0 0.0
        %1048 = vmatprep.subr.mxu0 0.0
        %1049 = vmatpush1.msra.mxu0 0.0
        %1050 = vmatprep.subr.mxu0 0.0
        %1051 = vmatpush1.msra.mxu0 0.0
        %1052 = vmatprep.subr.mxu0 0.0
        %1053 = vmatpush1.msra.mxu0 0.0
        %1054 = vmatprep.subr.mxu0 0.0
        %1055 = vmatpush1.msra.mxu0 0.0
        %1056 = vmatprep.subr.mxu0 0.0
        %1057 = vmatpush1.msra.mxu0 0.0
        %1058 = vmatprep.subr.mxu0 0.0
        %1059 = vmatpush1.msra.mxu0 0.0
        %1060 = vmatprep.subr.mxu0 0.0
        %1061 = vmatpush1.msra.mxu0 0.0
        %1062 = vmatprep.subr.mxu0 0.0
        %1063 = vmatpush1.msra.mxu0 0.0
        %1064 = vmatprep.subr.mxu0 0.0
        %1065 = vmatpush1.msra.mxu0 0.0
        %1066 = vmatprep.subr.mxu0 0.0
        %1067 = vmatpush1.msra.mxu0 0.0
        %1068 = vmatprep.subr.mxu0 0.0
        %1069 = vmatpush1.msra.mxu0 0.0
        %1070 = vmatprep.subr.mxu0 0.0
        %1071 = vmatpush1.msra.mxu0 0.0
        %1072 = vmatprep.subr.mxu0 0.0
        %1073 = vmatpush1.msra.mxu0 0.0
        %1074 = vmatprep.subr.mxu0 0.0
        %1075 = vmatpush1.msra.mxu0 0.0
        %1076 = vmatprep.subr.mxu0 0.0
        %1077 = vmatpush1.msra.mxu0 0.0
        %1078 = vmatprep.subr.mxu0 0.0
        %1079 = vmatpush1.msra.mxu0 0.0
        %1080 = vmatprep.subr.mxu0 0.0
        %1081 = vmatpush1.msra.mxu0 0.0
        %1082 = vmatprep.subr.mxu0 0.0
        %1083 = vmatpush1.msra.mxu0 0.0
        %1084 = vmatprep.subr.mxu0 0.0
        %1085 = vmatpush1.msra.mxu0 0.0
        %1086 = vmatprep.subr.mxu0 0.0
        %1087 = vmatpush1.msra.mxu0 0.0
        %1088 = vmatprep.subr.mxu0 0.0
        %1089 = vmatpush1.msra.mxu0 0.0
        %1090 = vmatprep.subr.mxu0 0.0
        %1091 = vmatpush1.msra.mxu0 0.0
        %1092 = vmatprep.subr.mxu0 0.0
        %1093 = vmatpush1.msra.mxu0 0.0
        %1094 = vmatprep.subr.mxu0 0.0
        %1095 = vmatpush1.msra.mxu0 0.0
        %1096 = vmatprep.subr.mxu0 0.0
        %1097 = vmatpush1.msra.mxu0 0.0
        %1098 = vmatprep.subr.mxu0 0.0
        %1099 = vmatpush1.msra.mxu0 0.0
        %1100 = vmatprep.subr.mxu0 0.0
        %1101 = vmatpush1.msra.mxu0 0.0
        %1102 = vmatprep.mubr.f32.mxu0 0.0
        %1103 = vmatmul.mubr.f32.gmra.mrb[0].mxu0 %v1032
        %v1104 = vpop.f32.mrb[0].mxu0
        %v1105 = vadd.f32 0.0, %v1104
        %v1106 = vpop.f32.mrb[0].mxu0
        %v1107 = vadd.f32 0.0, %v1106
        %1108 = vdwg.mxu0
        %v1109 = vadd.f32 %v1013, %v1105
        %v1110 = vadd.f32 %v1014, %v1107
        %1111 = vst [vmem:[#allocation2] sm:$0xff] %v1109
        %1112 = vst [vmem:[#allocation2 + $0x8] sm:$0xff] %v1110
        // Predicated region
        $region37: #{tpu_custom_call.1} parent=31 // pred_check
          %p1113 = pneg %p249
        $region38: #{tpu_custom_call.1} parent=31 // pred_check_branch
          %1115 = sbr.rel (%p1113) target = $region40
        $region39: #{tpu_custom_call.1} parent=31 // pred_region
          %v1116 = vld [vmem:[#allocation2] sm:$0xff]
          %v1117 = vld [vmem:[#allocation2 + $0x8] sm:$0xff]
          %v1118 = vld [vmem:[%s248] sm:$0xff]
          %1120 = vset.pattern.permute.xlu0 0
          %1121 = vperm.xlu0 %1120, %v1118
          %v1122 = vpop.permute.xlu0 %1121
          %v1124 = vadd.f32 %v1116, %v1122
          %v1125 = vadd.f32 %v1117, %v1122
          %vm1126 = vcmp.ge.f32.partialorder %v1124, 0.0
          %vm1127 = vcmp.ge.f32.partialorder %v1125, 0.0
          %v1128 = vmul.f32 %v1124, 0.2
          %v1129 = vmul.f32 %v1125, 0.2
          %v1130 = vsel %vm1126, %v1124, %v1128
          %v1131 = vsel %vm1127, %v1125, %v1129
          %1132 = vst [vmem:[%s228] sm:$0xff] %v1130
          %1133 = vst [vmem:[%s228 + $0x8] sm:$0xff] %v1131
        $region40: #{tpu_custom_call.1} parent=31 // pred_fallthru
          _
        %s1134 = sand.u32 %s128, 1
        %s1135 = scalar_lea.sflag [#allocation4], %s1134
        %s1136 = sand.u32 %s128, 1
        %s1137 = smul.addr %s1136, 16
        %s1138 = scalar_lea.vmem [#allocation3], %s1137
        // Predicated region
        $region41: #{tpu_custom_call.1} parent=31 // pred_check
          %p1139 = pneg %p138
        $region42: #{tpu_custom_call.1} parent=31 // pred_check_branch
          %1141 = sbr.rel (%p1139) target = $region44
        $region43: #{tpu_custom_call.1} parent=31 // pred_region
          %s1143 = ssub.s32 256, 256
          %1144 = vsyncadd %s1135, %s1143
          %s1145 = smul.addr %s23, 2
          %s1146 = smul.addr %s22, 2
          %s1147 = sadd.s32 %s1145, %s1146
          %s1148 = smul.addr %s1147, 128
          %s1149 = scalar_lea.hbm %s3, %s1148
          %s1151 = sshll.u32 %s1138, 4
          %s1152 = int_to_ptr.vmem [resolvable:$true] %s1151
          %1154 = dma.vmem_to_hbm [thread:$0]  %s1152, 256, %s1149, %s1135
        $region44: #{tpu_custom_call.1} parent=31 // pred_fallthru
          _
      $region32: #{tpu_custom_call.1} parent=5 // pred_fallthru
        _
      %p1155 = scmp.le.s32.totalorder 2, %s12
      // Predicated region
      $region45: #{tpu_custom_call.1} parent=5 // pred_check
        %p1156 = pneg %p1155
      $region46: #{tpu_custom_call.1} parent=5 // pred_check_branch
        %1158 = sbr.rel (%p1156) target = $region48
      $region47: #{tpu_custom_call.1} parent=5 // pred_region
        %s1159 = ssub.s32 %s12, 2
        // Predicated region
        $region49: #{tpu_custom_call.1} parent=47 // pred_check
          %p1160 = pneg %p144
        $region50: #{tpu_custom_call.1} parent=47 // pred_check_branch
          %1162 = sbr.rel (%p1160) target = $region52
        $region51: #{tpu_custom_call.1} parent=47 // pred_region
          %s1163 = sand.u32 %s129, 1
          %s1164 = scalar_lea.sflag [#allocation4], %s1163
          %s1165 = sand.u32 %s129, 1
          %s1166 = smul.addr %s1165, 16
          %s1167 = scalar_lea.vmem [#allocation3], %s1166
          %1168 = dma.done %s1164, 256
        $region52: #{tpu_custom_call.1} parent=47 // pred_fallthru
          _
      $region48: #{tpu_custom_call.1} parent=5 // pred_fallthru
        _
    $region6: #{tpu_custom_call.1} parent=1 // loop_footer
      %s16 = sadd.s32 1, %s12
    $region7: #{tpu_custom_call.1} parent=1 // loop_footer_branch
      %11 = sbr.rel target = $region3
    $region8: #{tpu_custom_call.1} parent=1 // loop_exit
      _
    %1169 = vsyncpa [#allocation4], 1
    %s1170 = scalar_lea.sflag [#allocation4], 1
    %1171 = vsyncpa %s1170, 1

</llo_original>
